<compile_context>
chip_gen: v6e
topology: v6e:2x2x1
jax: 0.10.0
libtpu: 0.0.40
codegen_flags: <defaults>
</compile_context>

<pallas_src>
import functools

import jax
import jax.numpy as jnp
from jax.experimental import pallas as pl
from jax.experimental.pallas import tpu as pltpu

HIDDEN = 32
BN_EPS = 1e-5
_LANES = 128
_MAX_TILE_N = 16384   # caps the unrolled lane reduction (<=128 vreg blocks) & trace size


def _round_up(x, m):
    return ((x + m - 1) // m) * m


def _vmem_budget():
    """(vmem_limit_bytes, per-step tile byte budget), sized per TPU generation."""
    try:
        cap = int(pltpu.get_tpu_info().vmem_capacity_bytes)
    except Exception:
        cap = 64 * 1024 * 1024            # conservative fallback = v7x physical VMEM
    vmem_limit = min(cap * 3 // 4, 96 * 1024 * 1024)   # v7x ~48 MiB, v5e/v6e 96 MiB
    tile_budget = min(vmem_limit // 2, 48 * 1024 * 1024)
    return vmem_limit, tile_budget


# ---------------------------------------------------------------------------
# Pass 1 (small Cin, recompute dataflow): h = w1 @ x_tile on the MXU, reduced
# into per-(batch, split) (32, 128) partial sum / sum-of-squares accumulators.
# h never touches HBM.  Ragged last-tile lanes are masked (no input padding).
# ---------------------------------------------------------------------------
def _stats_recompute_kernel(x_ref, w1_ref, sum_ref, sq_ref, *,
                            nt_inner, tile_n, n_total, ragged):
    s = pl.program_id(1)
    j = pl.program_id(2)

    # (32, Cin) @ (Cin, tn) -> (32, tn), f32 accumulation on the MXU.
    h = jnp.dot(w1_ref[...], x_ref[...], preferred_element_type=jnp.float32)

    if ragged:
        # Zero out lanes beyond the true N (boundary block carries garbage).
        lane = jax.lax.broadcasted_iota(jnp.int32, h.shape, 1)
        col = (s * nt_inner + j) * tile_n + lane
        h = jnp.where(col < n_total, h, 0.0)

    # Lane-block partial sums on the VPU (static 128-aligned slices); the final
    # 128 -> 1 lane reduce happens outside on a tiny (B, split, 32, 128) array.
    # (On v7x this is marginally VALU-bound at small Cin; an MXU h@ones or
    #  x-Gram formulation could move it off the VPU if profiles demand.)
    psum = h[:, 0:_LANES]
    psq = psum * psum
    for t in range(1, tile_n // _LANES):
        blk = h[:, t * _LANES:(t + 1) * _LANES]
        psum = psum + blk
        psq = psq + blk * blk

    @pl.when(j == 0)
    def _():
        sum_ref[...] = jnp.zeros_like(sum_ref)
        sq_ref[...] = jnp.zeros_like(sq_ref)

    sum_ref[...] += psum
    sq_ref[...] += psq


# ---------------------------------------------------------------------------
# Pass 1 (large Cin, stash dataflow): as above, but also writes h to HBM so
# pass 2 does not need to re-read the (larger) x.
# ---------------------------------------------------------------------------
def _stats_stash_kernel(x_ref, w1_ref, h_ref, sum_ref, sq_ref, *,
                        nt_inner, tile_n, n_total, ragged):
    s = pl.program_id(1)
    j = pl.program_id(2)

    h = jnp.dot(w1_ref[...], x_ref[...], preferred_element_type=jnp.float32)

    if ragged:
        lane = jax.lax.broadcasted_iota(jnp.int32, h.shape, 1)
        col = (s * nt_inner + j) * tile_n + lane
        h = jnp.where(col < n_total, h, 0.0)

    h_ref[...] = h.astype(h_ref.dtype)

    psum = h[:, 0:_LANES]
    psq = psum * psum
    for t in range(1, tile_n // _LANES):
        blk = h[:, t * _LANES:(t + 1) * _LANES]
        psum = psum + blk
        psq = psq + blk * blk

    @pl.when(j == 0)
    def _():
        sum_ref[...] = jnp.zeros_like(sum_ref)
        sq_ref[...] = jnp.zeros_like(sq_ref)

    sum_ref[...] += psum
    sq_ref[...] += psq


# ---------------------------------------------------------------------------
# Pass 2: fused BatchNorm affine + ReLU + second 1x1 conv + bias.
# Output block (num_classes, tn) is lane-dense along N; boundary columns of the
# last ragged tile are dropped by Pallas' masked boundary store.
# ---------------------------------------------------------------------------
def _recompute_bn_relu_conv2_kernel(x_ref, w1_ref, scale_ref, shift_ref,
                                    w2_ref, b2_ref, o_ref):
    h = jnp.dot(w1_ref[...], x_ref[...], preferred_element_type=jnp.float32)
    h = jnp.maximum(h * scale_ref[...] + shift_ref[...], 0.0)
    o_ref[...] = (
        jnp.dot(w2_ref[...], h, preferred_element_type=jnp.float32) + b2_ref[...]
    ).astype(o_ref.dtype)


def _stash_bn_relu_conv2_kernel(h_ref, scale_ref, shift_ref, w2_ref, b2_ref,
                                o_ref):
    h = h_ref[...].astype(jnp.float32)
    h = jnp.maximum(h * scale_ref[...] + shift_ref[...], 0.0)
    o_ref[...] = (
        jnp.dot(w2_ref[...], h, preferred_element_type=jnp.float32) + b2_ref[...]
    ).astype(o_ref.dtype)


@functools.partial(jax.jit, static_argnames=("tile_n",))
def scene_seg_head_pointnet(x, w1, gamma, beta, w2, b2, *, tile_n=None):
    """Forward pass of SceneSegHeadPointNet.

    Args:
      x:     (B, Cin, N) float32   -- NCW, like the PyTorch module.
      w1:    (32, Cin)   float32   -- Conv1d(Cin, 32, 1, bias=False) weight.
      gamma: (32,)       float32   -- BatchNorm1d weight.
      beta:  (32,)       float32   -- BatchNorm1d bias.
      w2:    (num_classes, 32) f32 -- Conv1d(32, num_classes, 1) weight.
      b2:    (num_classes,)    f32 -- Conv1d bias.
      tile_n: optional point-tile override (multiple of 128); None = adaptive.
    Returns:
      logits: (B, num_classes, N) float32
    """
    B, Cin, N = x.shape
    num_classes = w2.shape[0]
    M = B * N                                   # element count for BN stats

    x = x.astype(jnp.float32)
    w1 = w1.astype(jnp.float32)                 # (32, Cin)
    w2 = w2.astype(jnp.float32)                 # (num_classes, 32)
    b2c = b2.reshape(num_classes, 1).astype(jnp.float32)

    # Stash h to HBM instead of recomputing w1 @ x in pass 2 when re-reading x
    # would cost more HBM traffic than writing + re-reading h.
    stash_dtype = jnp.float32   # bf16 stash halves h traffic; kept f32 for numerics
    stash_bytes = jnp.dtype(stash_dtype).itemsize
    use_stash = Cin * 4 > 2 * HIDDEN * stash_bytes

    vmem_limit, tile_budget = _vmem_budget()

    # ---- adaptive point-tile size (multiple of 128 lanes) -----------------
    n_cap = _round_up(N, _LANES)
    if tile_n is None:
        if use_stash:
            per_lane = max(
                4 * 2 * Cin + stash_bytes * 2 * HIDDEN + 4 * 3 * HIDDEN,      # pass 1
                stash_bytes * 2 * HIDDEN + 4 * 2 * HIDDEN + 4 * 2 * num_classes)  # pass 2
        else:
            per_lane = max(
                4 * 2 * Cin + 4 * 3 * HIDDEN,                                  # pass 1
                4 * 2 * Cin + 4 * 2 * HIDDEN + 4 * 2 * num_classes)            # pass 2
        tn = (tile_budget // per_lane) // _LANES * _LANES
    else:
        tn = _round_up(tile_n, _LANES)
    tn = max(_LANES, min(tn, _MAX_TILE_N, n_cap))

    nt = -(-N // tn)                     # number of point tiles (last may be ragged)
    ragged = (nt * tn != N)

    # Small extra 'parallel' axis so pass 1 exposes >= 2 parallel work units
    # even at B == 1 (v7x has 2 TensorCores); only used when it splits evenly.
    if nt % 2 == 0:
        n_split, nt_inner = 2, nt // 2
    else:
        n_split, nt_inner = 1, nt

    def _cparams(sem):
        return pltpu.CompilerParams(dimension_semantics=sem,
                                    vmem_limit_bytes=vmem_limit)

    # ---- pass 1: per-(batch, split) partial channel sum / sum-of-squares --
    grid1 = (B, n_split, nt_inner)
    x_map1 = lambda b, s, j: (b, 0, s * nt_inner + j)
    w_map1 = lambda b, s, j: (0, 0)
    stat_map = lambda b, s, j: (b, s, 0, 0)
    stat_shape = jax.ShapeDtypeStruct((B, n_split, HIDDEN, _LANES), jnp.float32)

    if use_stash:
        stats_kernel = functools.partial(
            _stats_stash_kernel, nt_inner=nt_inner, tile_n=tn, n_total=N,
            ragged=ragged)
        h_stash, ch_sum_p, ch_sq_p = pl.pallas_call(
            stats_kernel,
            grid=grid1,
            in_specs=[
                pl.BlockSpec((None, Cin, tn), x_map1),
                pl.BlockSpec((HIDDEN, Cin), w_map1),
            ],
            out_specs=[
                pl.BlockSpec((None, HIDDEN, tn), x_map1),
                pl.BlockSpec((None, None, HIDDEN, _LANES), stat_map),
                pl.BlockSpec((None, None, HIDDEN, _LANES), stat_map),
            ],
            out_shape=(
                jax.ShapeDtypeStruct((B, HIDDEN, N), stash_dtype),
                stat_shape,
                stat_shape,
            ),
            compiler_params=_cparams(("parallel", "parallel", "arbitrary")),
        )(x, w1)
    else:
        stats_kernel = functools.partial(
            _stats_recompute_kernel, nt_inner=nt_inner, tile_n=tn, n_total=N,
            ragged=ragged)
        ch_sum_p, ch_sq_p = pl.pallas_call(
            stats_kernel,
            grid=grid1,
            in_specs=[
                pl.BlockSpec((None, Cin, tn), x_map1),
                pl.BlockSpec((HIDDEN, Cin), w_map1),
            ],
            out_specs=[
                pl.BlockSpec((None, None, HIDDEN, _LANES), stat_map),
                pl.BlockSpec((None, None, HIDDEN, _LANES), stat_map),
            ],
            out_shape=(stat_shape, stat_shape),
            compiler_params=_cparams(("parallel", "parallel", "arbitrary")),
        )(x, w1)

    # Tiny reductions + per-channel BN math stay in JAX (glue).
    ch_sum = jnp.sum(ch_sum_p, axis=(0, 1, 3))           # (32,)
    ch_sq = jnp.sum(ch_sq_p, axis=(0, 1, 3))             # (32,)
    mean = ch_sum / M
    var = ch_sq / M - mean * mean                        # biased var (train-mode BN)
    inv_std = jax.lax.rsqrt(var + BN_EPS)
    g = gamma.astype(jnp.float32)
    scale1 = g * inv_std
    shift1 = beta.astype(jnp.float32) - mean * scale1
    scale = scale1.reshape(HIDDEN, 1)
    shift = shift1.reshape(HIDDEN, 1)

    # ---- pass 2: y = w2 @ relu(scale * h + shift) + b2 --------------------
    grid2 = (B, nt)
    tile_map2 = lambda b, j: (b, 0, j)
    const_map2 = lambda b, j: (0, 0)
    out_spec = pl.BlockSpec((None, num_classes, tn), tile_map2)
    out_shape = jax.ShapeDtypeStruct((B, num_classes, N), jnp.float32)

    if use_stash:
        y = pl.pallas_call(
            _stash_bn_relu_conv2_kernel,
            grid=grid2,
            in_specs=[
                pl.BlockSpec((None, HIDDEN, tn), tile_map2),
                pl.BlockSpec((HIDDEN, 1), const_map2),
                pl.BlockSpec((HIDDEN, 1), const_map2),
                pl.BlockSpec((num_classes, HIDDEN), const_map2),
                pl.BlockSpec((num_classes, 1), const_map2),
            ],
            out_specs=out_spec,
            out_shape=out_shape,
            compiler_params=_cparams(("parallel", "parallel")),
        )(h_stash, scale, shift, w2, b2c)
    else:
        y = pl.pallas_call(
            _recompute_bn_relu_conv2_kernel,
            grid=grid2,
            in_specs=[
                pl.BlockSpec((None, Cin, tn), tile_map2),
                pl.BlockSpec((HIDDEN, Cin), const_map2),
                pl.BlockSpec((HIDDEN, 1), const_map2),
                pl.BlockSpec((HIDDEN, 1), const_map2),
                pl.BlockSpec((num_classes, HIDDEN), const_map2),
                pl.BlockSpec((num_classes, 1), const_map2),
            ],
            out_specs=out_spec,
            out_shape=out_shape,
            compiler_params=_cparams(("parallel", "parallel")),
        )(x, w1, scale, shift, w2, b2c)

    return y


def _reference(x, w1, gamma, beta, w2, b2):
    """Pure-JAX reference with identical semantics (for verification)."""
    hp = jax.lax.Precision.HIGHEST
    h = jnp.einsum("oc,bcn->bon", w1, x, precision=hp)            # (B, 32, N)
    mean = jnp.mean(h, axis=(0, 2), keepdims=True)
    var = jnp.mean((h - mean) ** 2, axis=(0, 2), keepdims=True)   # biased
    hn = (h - mean) * jax.lax.rsqrt(var + BN_EPS)
    hn = hn * gamma[None, :, None] + beta[None, :, None]
    hn = jnp.maximum(hn, 0.0)
    return jnp.einsum("oc,bcn->bon", w2, hn, precision=hp) + b2[None, :, None]


def _run_case(key, B, Cin, N, num_classes, tile_n):
    kx, kw1, kg, kb, kw2, kb2 = jax.random.split(key, 6)
    x = jax.random.normal(kx, (B, Cin, N), dtype=jnp.float32)
    w1 = jax.random.normal(kw1, (HIDDEN, Cin), dtype=jnp.float32) * 0.1
    gamma = 1.0 + 0.1 * jax.random.normal(kg, (HIDDEN,), dtype=jnp.float32)
    beta = 0.1 * jax.random.normal(kb, (HIDDEN,), dtype=jnp.float32)
    w2 = jax.random.normal(kw2, (num_classes, HIDDEN), dtype=jnp.float32) * 0.1
    b2 = 0.1 * jax.random.normal(kb2, (num_classes,), dtype=jnp.float32)

    out = scene_seg_head_pointnet(x, w1, gamma, beta, w2, b2, tile_n=tile_n)
    out = jax.block_until_ready(out)
    assert out.shape == (B, num_classes, N), out.shape
    ref = _reference(x, w1, gamma, beta, w2, b2)
    err = float(jnp.max(jnp.abs(out - ref)))
    assert err < 3e-4, err


if __name__ == "__main__":
    key = jax.random.PRNGKey(0)
    k1, k2, k3 = jax.random.split(key, 3)
    # Adaptive tile (single tile covers N), small-Cin recompute dataflow.
    _run_case(k1, B=2, Cin=16, N=256, num_classes=8, tile_n=None)
    # Ragged N (250 -> 2 tiles of 128): exercises the split parallel axis,
    # the pass-1 'arbitrary' accumulation and the last-tile lane masking.
    _run_case(k2, B=2, Cin=16, N=250, num_classes=8, tile_n=128)
    # Large Cin -> h-stash dataflow; ragged N, odd tile count, non-multiple-of-8
    # class count (full-dim output block).
    _run_case(k3, B=2, Cin=96, N=300, num_classes=13, tile_n=128)
    print("KERNEL_OK")
</pallas_src>

<mosaic_0001>
module attributes {stable_mosaic.version = 11 : i64} {
  func.func @_stats_recompute_kernel(%arg0: i32, %arg1: i32, %arg2: i32, %arg3: memref<1x16x256xf32, #tpu.memory_space<vmem>>, %arg4: memref<32x16xf32, #tpu.memory_space<vmem>>, %arg5: memref<1x1x32x128xf32, #tpu.memory_space<vmem>>, %arg6: memref<1x1x32x128xf32, #tpu.memory_space<vmem>>) attributes {dimension_semantics = [#tpu.dimension_semantics<parallel>, #tpu.dimension_semantics<parallel>, #tpu.dimension_semantics<arbitrary>], iteration_bounds = array<i64: 2, 1, 1>, scalar_prefetch = 0 : i64, scratch_operands = 0 : i64, tpu.core_type = #tpu.core_type<tc>, window_params = [{transform_indices = @transform_0, window_bounds = array<i64: 1, 16, 256>}, {pipeline_mode = #tpu.pipeline_mode<synchronous>, transform_indices = @transform_1, window_bounds = array<i64: 32, 16>}, {transform_indices = @transform_2, window_bounds = array<i64: 1, 1, 32, 128>}, {transform_indices = @transform_3, window_bounds = array<i64: 1, 1, 32, 128>}]} {
    %c0 = arith.constant 0 : index
    %c0_0 = arith.constant 0 : index
    %0 = vector.load %arg4[%c0, %c0_0] : memref<32x16xf32, #tpu.memory_space<vmem>>, vector<32x16xf32>
    %c0_1 = arith.constant 0 : index
    %c0_2 = arith.constant 0 : index
    %c0_3 = arith.constant 0 : index
    %1 = vector.load %arg3[%c0_1, %c0_2, %c0_3] : memref<1x16x256xf32, #tpu.memory_space<vmem>>, vector<1x16x256xf32>
    %2 = vector.shape_cast %1 : vector<1x16x256xf32> to vector<16x256xf32>
    %cst = arith.constant dense<0.000000e+00> : vector<32x256xf32>
    %3 = tpu.matmul %0, %2, %cst {dimension_numbers = #tpu.dot_dimension_numbers<[1], [0], [0], [1], [0, 0, 1, 1], [], []>} : vector<32x16xf32>, vector<16x256xf32>, vector<32x256xf32> -> vector<32x256xf32>
    %4 = vector.extract_strided_slice %3 {offsets = [0, 0], sizes = [32, 128], strides = [1, 1]} : vector<32x256xf32> to vector<32x128xf32>
    %5 = arith.mulf %4, %4 : vector<32x128xf32>
    %6 = vector.extract_strided_slice %3 {offsets = [0, 128], sizes = [32, 128], strides = [1, 1]} : vector<32x256xf32> to vector<32x128xf32>
    %7 = arith.addf %4, %6 : vector<32x128xf32>
    %8 = arith.mulf %6, %6 : vector<32x128xf32>
    %9 = arith.addf %5, %8 : vector<32x128xf32>
    %c0_i32 = arith.constant 0 : i32
    %10 = arith.cmpi eq, %arg2, %c0_i32 : i32
    %11 = arith.extui %10 : i1 to i32
    %c0_i32_4 = arith.constant 0 : i32
    %12 = arith.cmpi ne, %11, %c0_i32_4 : i32
    scf.if %12 {
      %cst_21 = arith.constant 0.000000e+00 : f32
      %25 = vector.broadcast %cst_21 : f32 to vector<32x128xf32>
      %c0_22 = arith.constant 0 : index
      %c0_23 = arith.constant 0 : index
      %c0_24 = arith.constant 0 : index
      %c0_25 = arith.constant 0 : index
      %26 = vector.load %arg5[%c0_22, %c0_23, %c0_24, %c0_25] : memref<1x1x32x128xf32, #tpu.memory_space<vmem>>, vector<1x1x32x128xf32>
      %27 = vector.shape_cast %26 : vector<1x1x32x128xf32> to vector<32x128xf32>
      %28 = vector.shape_cast %25 : vector<32x128xf32> to vector<1x1x32x128xf32>
      tpu.vector_store %arg5[%c0_22, %c0_23, %c0_24, %c0_25], %28 {strides = array<i32>} : memref<1x1x32x128xf32, #tpu.memory_space<vmem>>, vector<1x1x32x128xf32>,
      %cst_26 = arith.constant 0.000000e+00 : f32
      %29 = vector.broadcast %cst_26 : f32 to vector<32x128xf32>
      %c0_27 = arith.constant 0 : index
      %c0_28 = arith.constant 0 : index
      %c0_29 = arith.constant 0 : index
      %c0_30 = arith.constant 0 : index
      %30 = vector.load %arg6[%c0_27, %c0_28, %c0_29, %c0_30] : memref<1x1x32x128xf32, #tpu.memory_space<vmem>>, vector<1x1x32x128xf32>
      %31 = vector.shape_cast %30 : vector<1x1x32x128xf32> to vector<32x128xf32>
      %32 = vector.shape_cast %29 : vector<32x128xf32> to vector<1x1x32x128xf32>
      tpu.vector_store %arg6[%c0_27, %c0_28, %c0_29, %c0_30], %32 {strides = array<i32>} : memref<1x1x32x128xf32, #tpu.memory_space<vmem>>, vector<1x1x32x128xf32>,
    } else {
    }
    %c0_5 = arith.constant 0 : index
    %c0_6 = arith.constant 0 : index
    %c0_7 = arith.constant 0 : index
    %c0_8 = arith.constant 0 : index
    %13 = vector.load %arg5[%c0_5, %c0_6, %c0_7, %c0_8] : memref<1x1x32x128xf32, #tpu.memory_space<vmem>>, vector<1x1x32x128xf32>
    %14 = vector.shape_cast %13 : vector<1x1x32x128xf32> to vector<32x128xf32>
    %15 = arith.addf %14, %7 : vector<32x128xf32>
    %c0_9 = arith.constant 0 : index
    %c0_10 = arith.constant 0 : index
    %c0_11 = arith.constant 0 : index
    %c0_12 = arith.constant 0 : index
    %16 = vector.load %arg5[%c0_9, %c0_10, %c0_11, %c0_12] : memref<1x1x32x128xf32, #tpu.memory_space<vmem>>, vector<1x1x32x128xf32>
    %17 = vector.shape_cast %16 : vector<1x1x32x128xf32> to vector<32x128xf32>
    %18 = vector.shape_cast %15 : vector<32x128xf32> to vector<1x1x32x128xf32>
    tpu.vector_store %arg5[%c0_9, %c0_10, %c0_11, %c0_12], %18 {strides = array<i32>} : memref<1x1x32x128xf32, #tpu.memory_space<vmem>>, vector<1x1x32x128xf32>,
    %c0_13 = arith.constant 0 : index
    %c0_14 = arith.constant 0 : index
    %c0_15 = arith.constant 0 : index
    %c0_16 = arith.constant 0 : index
    %19 = vector.load %arg6[%c0_13, %c0_14, %c0_15, %c0_16] : memref<1x1x32x128xf32, #tpu.memory_space<vmem>>, vector<1x1x32x128xf32>
    %20 = vector.shape_cast %19 : vector<1x1x32x128xf32> to vector<32x128xf32>
    %21 = arith.addf %20, %9 : vector<32x128xf32>
    %c0_17 = arith.constant 0 : index
    %c0_18 = arith.constant 0 : index
    %c0_19 = arith.constant 0 : index
    %c0_20 = arith.constant 0 : index
    %22 = vector.load %arg6[%c0_17, %c0_18, %c0_19, %c0_20] : memref<1x1x32x128xf32, #tpu.memory_space<vmem>>, vector<1x1x32x128xf32>
    %23 = vector.shape_cast %22 : vector<1x1x32x128xf32> to vector<32x128xf32>
    %24 = vector.shape_cast %21 : vector<32x128xf32> to vector<1x1x32x128xf32>
    tpu.vector_store %arg6[%c0_17, %c0_18, %c0_19, %c0_20], %24 {strides = array<i32>} : memref<1x1x32x128xf32, #tpu.memory_space<vmem>>, vector<1x1x32x128xf32>,
    return
  }
  func.func @transform_0(%arg0: i32, %arg1: i32, %arg2: i32) -> (i32, i32, i32) {
    %c1_i32 = arith.constant 1 : i32
    %0 = arith.muli %arg1, %c1_i32 : i32
    %1 = arith.addi %0, %arg2 : i32
    %c0_i32 = arith.constant 0 : i32
    %c0_i32_0 = arith.constant 0 : i32
    return %arg0, %c0_i32, %1 : i32, i32, i32
  }
  func.func @transform_1(%arg0: i32, %arg1: i32, %arg2: i32) -> (i32, i32) {
    %c0_i32 = arith.constant 0 : i32
    %c0_i32_0 = arith.constant 0 : i32
    %c0_i32_1 = arith.constant 0 : i32
    return %c0_i32, %c0_i32_0 : i32, i32
  }
  func.func @transform_2(%arg0: i32, %arg1: i32, %arg2: i32) -> (i32, i32, i32, i32) {
    %c0_i32 = arith.constant 0 : i32
    %c0_i32_0 = arith.constant 0 : i32
    %c0_i32_1 = arith.constant 0 : i32
    return %arg0, %arg1, %c0_i32, %c0_i32_0 : i32, i32, i32, i32
  }
  func.func @transform_3(%arg0: i32, %arg1: i32, %arg2: i32) -> (i32, i32, i32, i32) {
    %c0_i32 = arith.constant 0 : i32
    %c0_i32_0 = arith.constant 0 : i32
    %c0_i32_1 = arith.constant 0 : i32
    return %arg0, %arg1, %c0_i32, %c0_i32_0 : i32, i32, i32, i32
  }
}

module attributes {stable_mosaic.version = 11 : i64} {
  func.func @_recompute_bn_relu_conv2_kernel(%arg0: i32, %arg1: i32, %arg2: memref<1x16x256xf32, #tpu.memory_space<vmem>>, %arg3: memref<32x16xf32, #tpu.memory_space<vmem>>, %arg4: memref<32x1xf32, #tpu.memory_space<vmem>>, %arg5: memref<32x1xf32, #tpu.memory_space<vmem>>, %arg6: memref<8x32xf32, #tpu.memory_space<vmem>>, %arg7: memref<8x1xf32, #tpu.memory_space<vmem>>, %arg8: memref<1x8x256xf32, #tpu.memory_space<vmem>>) attributes {dimension_semantics = [#tpu.dimension_semantics<parallel>, #tpu.dimension_semantics<parallel>], iteration_bounds = array<i64: 2, 1>, scalar_prefetch = 0 : i64, scratch_operands = 0 : i64, tpu.core_type = #tpu.core_type<tc>, window_params = [{transform_indices = @transform_0, window_bounds = array<i64: 1, 16, 256>}, {pipeline_mode = #tpu.pipeline_mode<synchronous>, transform_indices = @transform_1, window_bounds = array<i64: 32, 16>}, {pipeline_mode = #tpu.pipeline_mode<synchronous>, transform_indices = @transform_2, window_bounds = array<i64: 32, 1>}, {pipeline_mode = #tpu.pipeline_mode<synchronous>, transform_indices = @transform_3, window_bounds = array<i64: 32, 1>}, {pipeline_mode = #tpu.pipeline_mode<synchronous>, transform_indices = @transform_4, window_bounds = array<i64: 8, 32>}, {pipeline_mode = #tpu.pipeline_mode<synchronous>, transform_indices = @transform_5, window_bounds = array<i64: 8, 1>}, {transform_indices = @transform_6, window_bounds = array<i64: 1, 8, 256>}]} {
    %c0 = arith.constant 0 : index
    %c0_0 = arith.constant 0 : index
    %0 = vector.load %arg3[%c0, %c0_0] : memref<32x16xf32, #tpu.memory_space<vmem>>, vector<32x16xf32>
    %c0_1 = arith.constant 0 : index
    %c0_2 = arith.constant 0 : index
    %c0_3 = arith.constant 0 : index
    %1 = vector.load %arg2[%c0_1, %c0_2, %c0_3] : memref<1x16x256xf32, #tpu.memory_space<vmem>>, vector<1x16x256xf32>
    %2 = vector.shape_cast %1 : vector<1x16x256xf32> to vector<16x256xf32>
    %cst = arith.constant dense<0.000000e+00> : vector<32x256xf32>
    %3 = tpu.matmul %0, %2, %cst {dimension_numbers = #tpu.dot_dimension_numbers<[1], [0], [0], [1], [0, 0, 1, 1], [], []>} : vector<32x16xf32>, vector<16x256xf32>, vector<32x256xf32> -> vector<32x256xf32>
    %c0_4 = arith.constant 0 : index
    %c0_5 = arith.constant 0 : index
    %4 = vector.load %arg4[%c0_4, %c0_5] : memref<32x1xf32, #tpu.memory_space<vmem>>, vector<32x1xf32>
    %5 = vector.broadcast %4 : vector<32x1xf32> to vector<32x256xf32>
    %6 = arith.mulf %3, %5 : vector<32x256xf32>
    %c0_6 = arith.constant 0 : index
    %c0_7 = arith.constant 0 : index
    %7 = vector.load %arg5[%c0_6, %c0_7] : memref<32x1xf32, #tpu.memory_space<vmem>>, vector<32x1xf32>
    %8 = vector.broadcast %7 : vector<32x1xf32> to vector<32x256xf32>
    %9 = arith.addf %6, %8 : vector<32x256xf32>
    %cst_8 = arith.constant 0.000000e+00 : f32
    %10 = vector.broadcast %cst_8 : f32 to vector<32x256xf32>
    %11 = arith.maximumf %9, %10 : vector<32x256xf32>
    %c0_9 = arith.constant 0 : index
    %c0_10 = arith.constant 0 : index
    %12 = vector.load %arg6[%c0_9, %c0_10] : memref<8x32xf32, #tpu.memory_space<vmem>>, vector<8x32xf32>
    %cst_11 = arith.constant dense<0.000000e+00> : vector<8x256xf32>
    %13 = tpu.matmul %12, %11, %cst_11 {dimension_numbers = #tpu.dot_dimension_numbers<[1], [0], [0], [1], [0, 0, 1, 1], [], []>} : vector<8x32xf32>, vector<32x256xf32>, vector<8x256xf32> -> vector<8x256xf32>
    %c0_12 = arith.constant 0 : index
    %c0_13 = arith.constant 0 : index
    %14 = vector.load %arg7[%c0_12, %c0_13] : memref<8x1xf32, #tpu.memory_space<vmem>>, vector<8x1xf32>
    %15 = vector.broadcast %14 : vector<8x1xf32> to vector<8x256xf32>
    %16 = arith.addf %13, %15 : vector<8x256xf32>
    %c0_14 = arith.constant 0 : index
    %c0_15 = arith.constant 0 : index
    %c0_16 = arith.constant 0 : index
    %17 = vector.load %arg8[%c0_14, %c0_15, %c0_16] : memref<1x8x256xf32, #tpu.memory_space<vmem>>, vector<1x8x256xf32>
    %18 = vector.shape_cast %17 : vector<1x8x256xf32> to vector<8x256xf32>
    %19 = vector.shape_cast %16 : vector<8x256xf32> to vector<1x8x256xf32>
    tpu.vector_store %arg8[%c0_14, %c0_15, %c0_16], %19 {strides = array<i32>} : memref<1x8x256xf32, #tpu.memory_space<vmem>>, vector<1x8x256xf32>,
    return
  }
  func.func @transform_0(%arg0: i32, %arg1: i32) -> (i32, i32, i32) {
    %c0_i32 = arith.constant 0 : i32
    %c0_i32_0 = arith.constant 0 : i32
    return %arg0, %c0_i32, %arg1 : i32, i32, i32
  }
  func.func @transform_1(%arg0: i32, %arg1: i32) -> (i32, i32) {
    %c0_i32 = arith.constant 0 : i32
    %c0_i32_0 = arith.constant 0 : i32
    %c0_i32_1 = arith.constant 0 : i32
    return %c0_i32, %c0_i32_0 : i32, i32
  }
  func.func @transform_2(%arg0: i32, %arg1: i32) -> (i32, i32) {
    %c0_i32 = arith.constant 0 : i32
    %c0_i32_0 = arith.constant 0 : i32
    %c0_i32_1 = arith.constant 0 : i32
    return %c0_i32, %c0_i32_0 : i32, i32
  }
  func.func @transform_3(%arg0: i32, %arg1: i32) -> (i32, i32) {
    %c0_i32 = arith.constant 0 : i32
    %c0_i32_0 = arith.constant 0 : i32
    %c0_i32_1 = arith.constant 0 : i32
    return %c0_i32, %c0_i32_0 : i32, i32
  }
  func.func @transform_4(%arg0: i32, %arg1: i32) -> (i32, i32) {
    %c0_i32 = arith.constant 0 : i32
    %c0_i32_0 = arith.constant 0 : i32
    %c0_i32_1 = arith.constant 0 : i32
    return %c0_i32, %c0_i32_0 : i32, i32
  }
  func.func @transform_5(%arg0: i32, %arg1: i32) -> (i32, i32) {
    %c0_i32 = arith.constant 0 : i32
    %c0_i32_0 = arith.constant 0 : i32
    %c0_i32_1 = arith.constant 0 : i32
    return %c0_i32, %c0_i32_0 : i32, i32
  }
  func.func @transform_6(%arg0: i32, %arg1: i32) -> (i32, i32, i32) {
    %c0_i32 = arith.constant 0 : i32
    %c0_i32_0 = arith.constant 0 : i32
    return %arg0, %c0_i32, %arg1 : i32, i32, i32
  }
}

</mosaic_0001>

<llo_original>
// kernel: scene_seg_head_pointnet.2
$region0: #{scene_seg_head_pointnet.2}
  #allocation0 [shape = 'u32[]', space=smem, size = 0x4, offset = 0x4, fixed_abs, tag = 'smem constant byte address 0x4 - core index']
  #allocation1 [shape = 'u32[144,128]{1,0:T(1,128)}', space=vmem, size = 0x12000, scoped, tag = 'internal scratch']
  %s0 = inlined_call_operand.hbm [shape: f32[2,16,256], index: 0, kind: input, shape index: {}]
  %s1 = inlined_call_operand.vmem [shape: f32[32,16], index: 1, kind: input, shape index: {}]
  %s2 = inlined_call_operand.vmem [shape: f32[2,1,32,128], index: 2, kind: output, shape index: {0}]
  %s3 = inlined_call_operand.vmem [shape: f32[2,1,32,128], index: 3, kind: output, shape index: {1}]
  %4 = xla_tuple %s2, %s3
  %s5 = sld [smem:[#allocation0]]
  $region57: #{scene_seg_head_pointnet.2} parent=0
    _
  %s7 = ssub.s32 1, %s5
  %s8 = scalar_select 0, %s7, %s5
  $region1: #{scene_seg_head_pointnet.2} parent=0
    #allocation2 [shape = 'u8[32768]{0}', space=vmem, size = 0x8000, scoped, tag = 'input window, operand 0']
    #allocation3 [shape = 's32[2]{0}', space=sflag, size = 0x8, scoped, tag = 'scoped memory for scene_seg_head_pointnet.2']
    %9 = vsyncpa [#allocation3], 0
    %s10 = scalar_lea.sflag [#allocation3], 1
    %11 = vsyncpa %s10, 0
    loop: start=0, step=1, limit=4
    $region2: #{scene_seg_head_pointnet.2} parent=1 // loop_pre_header
      _
    $region3: #{scene_seg_head_pointnet.2} parent=1 // loop_header
      %s13 = sphi 0, %s17
      %p14 = scmp.ge.s32.totalorder %s13, 4
      %s20 = sphi 0, %s39
      %s21 = sphi 0, %s35
      %s22 = sphi 0, %s31
      %s23 = sphi 0, %s20
      %s24 = sphi 0, %s21
      %s25 = sphi 0, %s22
      %s26 = sphi 0, %s23
      %s27 = sphi 0, %s24
      %s28 = sphi 0, %s25
      %s46 = sphi 0, %s48
      %s49 = sphi 0, %s46
      %s50 = sphi 0, %s49
      %s66 = sphi 0, %s50
      %s70 = sphi 0, %s70
      %s72 = sphi 0, %s70
      %s73 = sphi 0, %s72
      %s87 = sphi 0, %s73
      %s95 = sphi 0, %s97
      %s98 = sphi 0, %s95
      %s99 = sphi 0, %s98
      %s115 = sphi 0, %s99
      %s123 = sphi 0, %s125
      %s126 = sphi 0, %s123
      %s127 = sphi 0, %s126
      %s143 = sphi 0, %s127
    $region4: #{scene_seg_head_pointnet.2} parent=1 // loop_header_branch
      %16 = sbr.rel (%p14) target = $region8
    $region5: #{scene_seg_head_pointnet.2} parent=1 // loop_body
      %s18 = ssub.s32 %s13, 1
      %s19 = ssub.s32 %s13, 2
      %s29 = sadd.s32 1, %s22
      %p30 = scmp.ge.s32.totalorder %s29, 1
      %s31 = scalar_select %p30, 0, %s29
      %s32 = sadd.s32 1, %s21
      %s33 = scalar_select %p30, %s32, %s21
      %p34 = scmp.ge.s32.totalorder %s33, 1
      %s35 = scalar_select %p34, 0, %s33
      %s36 = sadd.s32 1, %s20
      %s37 = scalar_select %p34, %s36, %s20
      %p38 = scmp.ge.s32.totalorder %s37, 2
      %s39 = scalar_select %p38, 0, %s37
      %s40 = sadd.s32 %s21, %s22
      %s41 = sadd.s32 %s35, %s31
      %s42 = ssub.s32 %s20, %s39
      %s43 = ssub.s32 %s40, %s41
      %s44 = sor.u32 %s42, %s43
      %p45 = scmp.eq.s32.totalorder %s44, 0
      %s47 = sadd.s32 %s46, 1
      %s48 = scalar_select %p45, %s46, %s47
      %p51 = pneg %p45
      %p52 = scmp.eq.s32.totalorder %s13, 1
      %p53 = por %p51, %p52
      %p54 = scmp.ne.s32.totalorder %s46, %s49
      %p55 = scmp.eq.s32.totalorder %s13, 0
      %p56 = por %p54, %p55
      %p57 = scmp.ne.s32.totalorder %s46, %s49
      %p58 = scmp.eq.s32.totalorder %s18, 1
      %p59 = por %p57, %p58
      %p60 = scmp.ne.s32.totalorder %s49, %s50
      %p61 = scmp.eq.s32.totalorder %s18, 0
      %p62 = por %p60, %p61
      %p63 = scmp.ne.s32.totalorder %s49, %s50
      %p64 = scmp.eq.s32.totalorder %s19, 1
      %p65 = por %p63, %p64
      %p67 = scmp.ne.s32.totalorder %s50, %s66
      %p68 = scmp.eq.s32.totalorder %s19, 0
      %p69 = por %p67, %p68
      %s71 = sadd.s32 %s70, 1
      %p74 = scmp.eq.s32.totalorder %s13, 1
      %p75 = scmp.ne.s32.totalorder %s70, %s72
      %p76 = scmp.eq.s32.totalorder %s13, 0
      %p77 = por %p75, %p76
      %p78 = scmp.ne.s32.totalorder %s70, %s72
      %p79 = scmp.eq.s32.totalorder %s18, 1
      %p80 = por %p78, %p79
      %p81 = scmp.ne.s32.totalorder %s72, %s73
      %p82 = scmp.eq.s32.totalorder %s18, 0
      %p83 = por %p81, %p82
      %p84 = scmp.ne.s32.totalorder %s72, %s73
      %p85 = scmp.eq.s32.totalorder %s19, 1
      %p86 = por %p84, %p85
      %p88 = scmp.ne.s32.totalorder %s73, %s87
      %p89 = scmp.eq.s32.totalorder %s19, 0
      %p90 = por %p88, %p89
      %s91 = ssub.s32 %s20, %s39
      %s92 = ssub.s32 %s21, %s35
      %s93 = sor.u32 %s91, %s92
      %p94 = scmp.eq.s32.totalorder %s93, 0
      %s96 = sadd.s32 %s95, 1
      %s97 = scalar_select %p94, %s95, %s96
      %p100 = pneg %p94
      %p101 = scmp.eq.s32.totalorder %s13, 1
      %p102 = por %p100, %p101
      %p103 = scmp.ne.s32.totalorder %s95, %s98
      %p104 = scmp.eq.s32.totalorder %s13, 0
      %p105 = por %p103, %p104
      %p106 = scmp.ne.s32.totalorder %s95, %s98
      %p107 = scmp.eq.s32.totalorder %s18, 1
      %p108 = por %p106, %p107
      %p109 = scmp.ne.s32.totalorder %s98, %s99
      %p110 = scmp.eq.s32.totalorder %s18, 0
      %p111 = por %p109, %p110
      %p112 = scmp.ne.s32.totalorder %s98, %s99
      %p113 = scmp.eq.s32.totalorder %s19, 1
      %p114 = por %p112, %p113
      %p116 = scmp.ne.s32.totalorder %s99, %s115
      %p117 = scmp.eq.s32.totalorder %s19, 0
      %p118 = por %p116, %p117
      %s119 = ssub.s32 %s20, %s39
      %s120 = ssub.s32 %s21, %s35
      %s121 = sor.u32 %s119, %s120
      %p122 = scmp.eq.s32.totalorder %s121, 0
      %s124 = sadd.s32 %s123, 1
      %s125 = scalar_select %p122, %s123, %s124
      %p128 = pneg %p122
      %p129 = scmp.eq.s32.totalorder %s13, 1
      %p130 = por %p128, %p129
      %p131 = scmp.ne.s32.totalorder %s123, %s126
      %p132 = scmp.eq.s32.totalorder %s13, 0
      %p133 = por %p131, %p132
      %p134 = scmp.ne.s32.totalorder %s123, %s126
      %p135 = scmp.eq.s32.totalorder %s18, 1
      %p136 = por %p134, %p135
      %p137 = scmp.ne.s32.totalorder %s126, %s127
      %p138 = scmp.eq.s32.totalorder %s18, 0
      %p139 = por %p137, %p138
      %p140 = scmp.ne.s32.totalorder %s126, %s127
      %p141 = scmp.eq.s32.totalorder %s19, 1
      %p142 = por %p140, %p141
      %p144 = scmp.ne.s32.totalorder %s127, %s143
      %p145 = scmp.eq.s32.totalorder %s19, 0
      %p146 = por %p144, %p145
      %p147 = scmp.le.s32.totalorder 1, %s13
      %p148 = scmp.lt.s32.totalorder %s13, 3
      %p149 = pnand %p147, %p148
      %p150 = pneg %p149
      // Predicated region
      $region9: #{scene_seg_head_pointnet.2} parent=5 // pred_check
        _
      $region10: #{scene_seg_head_pointnet.2} parent=5 // pred_check_branch
        %152 = sbr.rel (%p149) target = $region12
      $region11: #{scene_seg_head_pointnet.2} parent=5 // pred_region
        %s153 = ssub.s32 %s13, 1
        // Predicated region
        $region13: #{scene_seg_head_pointnet.2} parent=11 // pred_check
          %p154 = pneg %p83
        $region14: #{scene_seg_head_pointnet.2} parent=11 // pred_check_branch
          %156 = sbr.rel (%p154) target = $region16
        $region15: #{scene_seg_head_pointnet.2} parent=11 // pred_region
          _
        $region16: #{scene_seg_head_pointnet.2} parent=11 // pred_fallthru
          _
      $region12: #{scene_seg_head_pointnet.2} parent=5 // pred_fallthru
        _
      %p157 = scmp.lt.s32.totalorder %s13, 2
      // Predicated region
      $region17: #{scene_seg_head_pointnet.2} parent=5 // pred_check
        %p158 = pneg %p157
      $region18: #{scene_seg_head_pointnet.2} parent=5 // pred_check_branch
        %160 = sbr.rel (%p158) target = $region20
      $region19: #{scene_seg_head_pointnet.2} parent=5 // pred_region
        // Predicated region
        $region21: #{scene_seg_head_pointnet.2} parent=19 // pred_check
          %p161 = pneg %p56
        $region22: #{scene_seg_head_pointnet.2} parent=19 // pred_check_branch
          %163 = sbr.rel (%p161) target = $region24
        $region23: #{scene_seg_head_pointnet.2} parent=19 // pred_region
          %s164 = sand.u32 %s46, 1
          %s165 = scalar_lea.sflag [#allocation3], %s164
          %s166 = sand.u32 %s46, 1
          %s167 = smul.addr %s166, 32
          %s168 = scalar_lea.vmem [#allocation2], %s167
          %s169 = sadd.s32 %s21, %s22
          %s170 = smul.u32 2, %s169
          %s172 = ssub.s32 512, 512
          %173 = vsyncadd %s165, %s172
          %s174 = smul.addr %s20, 4
          %s175 = sadd.s32 %s170, %s174
          %s176 = smul.addr %s175, 128
          %s177 = scalar_lea.hbm %s0, %s176
          %s178 = sshll.u32 %s168, 4
          %s179 = int_to_ptr.vmem [resolvable:$true] %s178
          %184 = dma.hbm_to_vmem [thread:$0]  %s177, 512, %s179, %s165, 256, 256, 16
        $region24: #{scene_seg_head_pointnet.2} parent=19 // pred_fallthru
          _
      $region20: #{scene_seg_head_pointnet.2} parent=5 // pred_fallthru
        _
      %p185 = scmp.le.s32.totalorder 1, %s13
      %p186 = scmp.lt.s32.totalorder %s13, 3
      %p187 = pnand %p185, %p186
      %p188 = pneg %p187
      // Predicated region
      $region25: #{scene_seg_head_pointnet.2} parent=5 // pred_check
        _
      $region26: #{scene_seg_head_pointnet.2} parent=5 // pred_check_branch
        %190 = sbr.rel (%p187) target = $region28
      $region27: #{scene_seg_head_pointnet.2} parent=5 // pred_region
        %s191 = ssub.s32 %s13, 1
        %s192 = sand.u32 %s49, 1
        %s193 = scalar_lea.sflag [#allocation3], %s192
        %s194 = sand.u32 %s49, 1
        %s195 = smul.addr %s194, 32
        %s196 = scalar_lea.vmem [#allocation2], %s195
        // Predicated region
        $region29: #{scene_seg_head_pointnet.2} parent=27 // pred_check
          %p197 = pneg %p62
        $region30: #{scene_seg_head_pointnet.2} parent=27 // pred_check_branch
          %199 = sbr.rel (%p197) target = $region32
        $region31: #{scene_seg_head_pointnet.2} parent=27 // pred_region
          %200 = dma.done %s193, 512
        $region32: #{scene_seg_head_pointnet.2} parent=27 // pred_fallthru
          _
        %s201 = sand.u32 %s49, 1
        %s202 = scalar_lea.sflag [#allocation3], %s201
        %s203 = sand.u32 %s49, 1
        %s204 = smul.addr %s203, 32
        %s205 = scalar_lea.vmem [#allocation2], %s204
        %p206 = pneg %p62
        %p207 = pneg %p59
        %p208 = pneg %p83
        %p209 = pneg %p80
        %p210 = pneg %p111
        %p211 = pneg %p108
        %p212 = scmp.lt.s32.totalorder %s23, 1
        %s213 = scalar_select %p212, %s23, 1
        %p214 = scmp.lt.s32.totalorder %s24, 0
        %s215 = scalar_select %p214, %s24, 0
        %s216 = smul.addr %s215, 4
        %s217 = smul.addr %s213, 4
        %s218 = sadd.s32 %s216, %s217
        %s219 = smul.addr %s218, 8
        %s220 = scalar_lea.vmem %s2, %s219
        %p221 = pneg %p139
        %p222 = pneg %p136
        %p223 = scmp.lt.s32.totalorder %s23, 1
        %s224 = scalar_select %p223, %s23, 1
        %p225 = scmp.lt.s32.totalorder %s24, 0
        %s226 = scalar_select %p225, %s24, 0
        %s227 = smul.addr %s226, 4
        %s228 = smul.addr %s224, 4
        %s229 = sadd.s32 %s227, %s228
        %s230 = smul.addr %s229, 8
        %s231 = scalar_lea.vmem %s3, %s230
        %s232 = sadd.s32 %s24, %s25
        %s233 = smul.u32 2, %s232
        %p234 = scmp.lt.s32.totalorder %s23, 1
        %s235 = scalar_select %p234, %s23, 1
        %p236 = scmp.lt.s32.totalorder %s24, 0
        %s237 = scalar_select %p236, %s24, 0
        %s238 = smul.addr %s237, 4
        %s239 = smul.addr %s235, 4
        %s240 = sadd.s32 %s238, %s239
        %s241 = smul.addr %s240, 8
        %s242 = scalar_lea.vmem %s2, %s241
        %p243 = scmp.lt.s32.totalorder %s23, 1
        %s244 = scalar_select %p243, %s23, 1
        %p245 = scmp.lt.s32.totalorder %s24, 0
        %s246 = scalar_select %p245, %s24, 0
        %s247 = smul.addr %s246, 4
        %s248 = smul.addr %s244, 4
        %s249 = sadd.s32 %s247, %s248
        %s250 = smul.addr %s249, 8
        %s251 = scalar_lea.vmem %s3, %s250
        %v252 = vld [vmem:[%s1] sm:$0xff]
        %v253 = vld [vmem:[%s1 + $0x8] sm:$0xff]
        %v254 = vld [vmem:[%s1 + $0x10] sm:$0xff]
        %v255 = vld [vmem:[%s1 + $0x18] sm:$0xff]
        %v256 = vld [vmem:[%s196] sm:$0xff]
        %v257 = vld [vmem:[%s196 + $0x8] sm:$0xff]
        %v258 = vld [vmem:[%s196 + $0x10] sm:$0xff]
        %v259 = vld [vmem:[%s196 + $0x18] sm:$0xff]
        %vm260 = vcmask 130048
        %v262 = vsel %vm260, %v252, 0
        %v265 = vsel %vm260, %v253, 0
        %v268 = vsel %vm260, %v254, 0
        %v271 = vsel %vm260, %v255, 0
        %273 = vmatprep.subr.mxu0 0.0
        %274 = vmatpush1.msra.mxu0 0.0
        %275 = vmatprep.subr.mxu0 0.0
        %276 = vmatpush1.msra.mxu0 0.0
        %277 = vmatprep.subr.mxu0 0.0
        %278 = vmatpush1.msra.mxu0 0.0
        %279 = vmatprep.subr.mxu0 0.0
        %280 = vmatpush1.msra.mxu0 0.0
        %281 = vmatprep.subr.mxu0 0.0
        %282 = vmatpush1.msra.mxu0 0.0
        %283 = vmatprep.subr.mxu0 0.0
        %284 = vmatpush1.msra.mxu0 0.0
        %285 = vmatprep.subr.mxu0 0.0
        %286 = vmatpush1.msra.mxu0 0.0
        %287 = vmatprep.subr.mxu0 0.0
        %288 = vmatpush1.msra.mxu0 0.0
        %289 = vmatprep.subr.mxu0 0.0
        %290 = vmatpush1.msra.mxu0 0.0
        %291 = vmatprep.subr.mxu0 0.0
        %292 = vmatpush1.msra.mxu0 0.0
        %293 = vmatprep.subr.mxu0 0.0
        %294 = vmatpush1.msra.mxu0 0.0
        %295 = vmatprep.subr.mxu0 0.0
        %296 = vmatpush1.msra.mxu0 0.0
        %297 = vmatprep.subr.mxu0 0.0
        %298 = vmatpush1.msra.mxu0 0.0
        %299 = vmatprep.subr.mxu0 0.0
        %300 = vmatpush1.msra.mxu0 0.0
        %301 = vmatprep.subr.mxu0 %v259
        %302 = vmatpush1.msra.mxu0 %v258
        %303 = vmatprep.subr.mxu0 %v257
        %304 = vmatpush1.msra.mxu0 %v256
        %305 = vmatprep.subr.mxu0 0.0
        %306 = vmatpush2.msra.mxu0 0.0
        %307 = vmatprep.subr.mxu0 0.0
        %308 = vmatpush2.msra.mxu0 0.0
        %309 = vmatprep.subr.mxu0 0.0
        %310 = vmatpush2.msra.mxu0 0.0
        %311 = vmatprep.subr.mxu0 0.0
        %312 = vmatpush2.msra.mxu0 0.0
        %313 = vmatprep.subr.mxu0 0.0
        %314 = vmatpush2.msra.mxu0 0.0
        %315 = vmatprep.subr.mxu0 0.0
        %316 = vmatpush2.msra.mxu0 0.0
        %317 = vmatprep.subr.mxu0 0.0
        %318 = vmatpush2.msra.mxu0 0.0
        %319 = vmatprep.subr.mxu0 0.0
        %320 = vmatpush2.msra.mxu0 0.0
        %321 = vmatprep.subr.mxu0 0.0
        %322 = vmatpush2.msra.mxu0 0.0
        %323 = vmatprep.subr.mxu0 0.0
        %324 = vmatpush2.msra.mxu0 0.0
        %325 = vmatprep.subr.mxu0 0.0
        %326 = vmatpush2.msra.mxu0 0.0
        %327 = vmatprep.subr.mxu0 0.0
        %328 = vmatpush2.msra.mxu0 0.0
        %329 = vmatprep.subr.mxu0 0.0
        %330 = vmatpush2.msra.mxu0 0.0
        %331 = vmatprep.subr.mxu0 0.0
        %332 = vmatpush2.msra.mxu0 0.0
        %333 = vmatprep.subr.mxu0 0.0
        %334 = vmatpush2.msra.mxu0 0.0
        %335 = vmatprep.subr.mxu0 0.0
        %336 = vmatpush2.msra.mxu0 0.0
        %337 = vmatprep.mubr.f32.mxu0 0.0
        %338 = vmatmul.mubr.f32.gmra.mxu0 %v262
        %v339 = vpop.f32.mrf.mxu0
        %v340 = vadd.f32 0.0, %v339
        %v341 = vpop.f32.mrf.mxu0
        %v342 = vadd.f32 0.0, %v341
        %343 = vmatprep.mubr.f32.mxu0 0.0
        %344 = vmatmul.mubr.f32.gmra.mxu0 %v265
        %v345 = vpop.f32.mrf.mxu0
        %v346 = vadd.f32 0.0, %v345
        %v347 = vpop.f32.mrf.mxu0
        %v348 = vadd.f32 0.0, %v347
        %349 = vmatprep.mubr.f32.mxu0 0.0
        %350 = vmatmul.mubr.f32.gmra.mxu0 %v268
        %v351 = vpop.f32.mrf.mxu0
        %v352 = vadd.f32 0.0, %v351
        %v353 = vpop.f32.mrf.mxu0
        %v354 = vadd.f32 0.0, %v353
        %355 = vmatprep.mubr.f32.mxu0 0.0
        %356 = vmatmul.mubr.f32.gmra.mxu0 %v271
        %v357 = vpop.f32.mrf.mxu0
        %v358 = vadd.f32 0.0, %v357
        %v359 = vpop.f32.mrf.mxu0
        %v360 = vadd.f32 0.0, %v359
        %361 = vdwg.mxu0
        %v362 = vmul.f32 %v340, %v340
        %v363 = vmul.f32 %v346, %v346
        %v364 = vmul.f32 %v352, %v352
        %v365 = vmul.f32 %v358, %v358
        %v366 = vadd.f32 %v340, %v342
        %v367 = vadd.f32 %v346, %v348
        %v368 = vadd.f32 %v352, %v354
        %v369 = vadd.f32 %v358, %v360
        %v370 = vmul.f32 %v342, %v342
        %v371 = vmul.f32 %v348, %v348
        %v372 = vmul.f32 %v354, %v354
        %v373 = vmul.f32 %v360, %v360
        %v374 = vadd.f32 %v362, %v370
        %v375 = vadd.f32 %v363, %v371
        %v376 = vadd.f32 %v364, %v372
        %v377 = vadd.f32 %v365, %v373
        %p378 = scmp.eq.s32.totalorder %s25, 0
        // Predicated region
        $region33: #{scene_seg_head_pointnet.2} parent=27 // pred_check
          %p379 = pneg %p378
        $region34: #{scene_seg_head_pointnet.2} parent=27 // pred_check_branch
          %381 = sbr.rel (%p379) target = $region36
        $region35: #{scene_seg_head_pointnet.2} parent=27 // pred_region
          %382 = vst [vmem:[%s242] sm:$0xff] 0.0
          %383 = vst [vmem:[%s242 + $0x8] sm:$0xff] 0.0
          %384 = vst [vmem:[%s242 + $0x10] sm:$0xff] 0.0
          %385 = vst [vmem:[%s242 + $0x18] sm:$0xff] 0.0
          %386 = vst [vmem:[%s251] sm:$0xff] 0.0
          %387 = vst [vmem:[%s251 + $0x8] sm:$0xff] 0.0
          %388 = vst [vmem:[%s251 + $0x10] sm:$0xff] 0.0
          %389 = vst [vmem:[%s251 + $0x18] sm:$0xff] 0.0
        $region36: #{scene_seg_head_pointnet.2} parent=27 // pred_fallthru
          _
        %v390 = vld [vmem:[%s242] sm:$0xff]
        %v391 = vld [vmem:[%s242 + $0x8] sm:$0xff]
        %v392 = vld [vmem:[%s242 + $0x10] sm:$0xff]
        %v393 = vld [vmem:[%s242 + $0x18] sm:$0xff]
        %v394 = vadd.f32 %v390, %v366
        %v395 = vadd.f32 %v391, %v367
        %v396 = vadd.f32 %v392, %v368
        %v397 = vadd.f32 %v393, %v369
        %398 = vst [vmem:[%s242] sm:$0xff] %v394
        %399 = vst [vmem:[%s242 + $0x8] sm:$0xff] %v395
        %400 = vst [vmem:[%s242 + $0x10] sm:$0xff] %v396
        %401 = vst [vmem:[%s242 + $0x18] sm:$0xff] %v397
        %v402 = vld [vmem:[%s251] sm:$0xff]
        %v403 = vld [vmem:[%s251 + $0x8] sm:$0xff]
        %v404 = vld [vmem:[%s251 + $0x10] sm:$0xff]
        %v405 = vld [vmem:[%s251 + $0x18] sm:$0xff]
        %v406 = vadd.f32 %v402, %v374
        %v407 = vadd.f32 %v403, %v375
        %v408 = vadd.f32 %v404, %v376
        %v409 = vadd.f32 %v405, %v377
        %410 = vst [vmem:[%s251] sm:$0xff] %v406
        %411 = vst [vmem:[%s251 + $0x8] sm:$0xff] %v407
        %412 = vst [vmem:[%s251 + $0x10] sm:$0xff] %v408
        %413 = vst [vmem:[%s251 + $0x18] sm:$0xff] %v409
        %p414 = scmp.lt.s32.totalorder %s23, 1
        %s415 = scalar_select %p414, %s23, 1
        %p416 = scmp.lt.s32.totalorder %s24, 0
        %s417 = scalar_select %p416, %s24, 0
        %s418 = smul.addr %s417, 4
        %s419 = smul.addr %s415, 4
        %s420 = sadd.s32 %s418, %s419
        %s421 = smul.addr %s420, 8
        %s422 = scalar_lea.vmem %s2, %s421
        %p423 = scmp.lt.s32.totalorder %s23, 1
        %s424 = scalar_select %p423, %s23, 1
        %p425 = scmp.lt.s32.totalorder %s24, 0
        %s426 = scalar_select %p425, %s24, 0
        %s427 = smul.addr %s426, 4
        %s428 = smul.addr %s424, 4
        %s429 = sadd.s32 %s427, %s428
        %s430 = smul.addr %s429, 8
        %s431 = scalar_lea.vmem %s3, %s430
        // Predicated region
        $region37: #{scene_seg_head_pointnet.2} parent=27 // pred_check
          %p432 = pneg %p108
        $region38: #{scene_seg_head_pointnet.2} parent=27 // pred_check_branch
          %434 = sbr.rel (%p432) target = $region40
        $region39: #{scene_seg_head_pointnet.2} parent=27 // pred_region
          _
        $region40: #{scene_seg_head_pointnet.2} parent=27 // pred_fallthru
          _
        // Predicated region
        $region41: #{scene_seg_head_pointnet.2} parent=27 // pred_check
          %p435 = pneg %p136
        $region42: #{scene_seg_head_pointnet.2} parent=27 // pred_check_branch
          %437 = sbr.rel (%p435) target = $region44
        $region43: #{scene_seg_head_pointnet.2} parent=27 // pred_region
          _
        $region44: #{scene_seg_head_pointnet.2} parent=27 // pred_fallthru
          _
      $region28: #{scene_seg_head_pointnet.2} parent=5 // pred_fallthru
        _
      %p438 = scmp.le.s32.totalorder 2, %s13
      // Predicated region
      $region45: #{scene_seg_head_pointnet.2} parent=5 // pred_check
        %p439 = pneg %p438
      $region46: #{scene_seg_head_pointnet.2} parent=5 // pred_check_branch
        %441 = sbr.rel (%p439) target = $region48
      $region47: #{scene_seg_head_pointnet.2} parent=5 // pred_region
        %s442 = ssub.s32 %s13, 2
        // Predicated region
        $region49: #{scene_seg_head_pointnet.2} parent=47 // pred_check
          %p443 = pneg %p114
        $region50: #{scene_seg_head_pointnet.2} parent=47 // pred_check_branch
          %445 = sbr.rel (%p443) target = $region52
        $region51: #{scene_seg_head_pointnet.2} parent=47 // pred_region
          %p446 = scmp.lt.s32.totalorder %s26, 1
          %s447 = scalar_select %p446, %s26, 1
          %p448 = scmp.lt.s32.totalorder %s27, 0
          %s449 = scalar_select %p448, %s27, 0
          %s450 = smul.addr %s449, 4
          %s451 = smul.addr %s447, 4
          %s452 = sadd.s32 %s450, %s451
          %s453 = smul.addr %s452, 8
          %s454 = scalar_lea.vmem %s2, %s453
        $region52: #{scene_seg_head_pointnet.2} parent=47 // pred_fallthru
          _
        // Predicated region
        $region53: #{scene_seg_head_pointnet.2} parent=47 // pred_check
          %p455 = pneg %p142
        $region54: #{scene_seg_head_pointnet.2} parent=47 // pred_check_branch
          %457 = sbr.rel (%p455) target = $region56
        $region55: #{scene_seg_head_pointnet.2} parent=47 // pred_region
          %p458 = scmp.lt.s32.totalorder %s26, 1
          %s459 = scalar_select %p458, %s26, 1
          %p460 = scmp.lt.s32.totalorder %s27, 0
          %s461 = scalar_select %p460, %s27, 0
          %s462 = smul.addr %s461, 4
          %s463 = smul.addr %s459, 4
          %s464 = sadd.s32 %s462, %s463
          %s465 = smul.addr %s464, 8
          %s466 = scalar_lea.vmem %s3, %s465
        $region56: #{scene_seg_head_pointnet.2} parent=47 // pred_fallthru
          _
      $region48: #{scene_seg_head_pointnet.2} parent=5 // pred_fallthru
        _
    $region6: #{scene_seg_head_pointnet.2} parent=1 // loop_footer
      %s17 = sadd.s32 1, %s13
    $region7: #{scene_seg_head_pointnet.2} parent=1 // loop_footer_branch
      %12 = sbr.rel target = $region3
    $region8: #{scene_seg_head_pointnet.2} parent=1 // loop_exit
      _
    %467 = vsyncpa [#allocation3], 1
    %s468 = scalar_lea.sflag [#allocation3], 1
    %469 = vsyncpa %s468, 1

// kernel: scene_seg_head_pointnet.3
$region0: #{scene_seg_head_pointnet.3}
  #allocation0 [shape = 'u32[]', space=smem, size = 0x4, offset = 0x4, fixed_abs, tag = 'smem constant byte address 0x4 - core index']
  #allocation1 [shape = 'u32[144,128]{1,0:T(1,128)}', space=vmem, size = 0x12000, scoped, tag = 'internal scratch']
  %s0 = inlined_call_operand.vmem [shape: f32[2,16,256], index: 0, kind: input, shape index: {}]
  %s1 = inlined_call_operand.vmem [shape: f32[32,16], index: 1, kind: input, shape index: {}]
  %s2 = inlined_call_operand.vmem [shape: f32[32,1], index: 2, kind: input, shape index: {}]
  %s3 = inlined_call_operand.vmem [shape: f32[32,1], index: 3, kind: input, shape index: {}]
  %s4 = inlined_call_operand.vmem [shape: f32[8,32], index: 4, kind: input, shape index: {}]
  %s5 = inlined_call_operand.vmem [shape: f32[8,1], index: 5, kind: input, shape index: {}]
  %s6 = inlined_call_operand.hbm [shape: f32[2,8,256], index: 6, kind: output, shape index: {}]
  %s7 = sld [smem:[#allocation0]]
  $region57: #{scene_seg_head_pointnet.3} parent=0
    _
  %s9 = ssub.s32 1, %s7
  %s10 = scalar_select 0, %s9, %s7
  $region1: #{scene_seg_head_pointnet.3} parent=0
    #allocation2 [shape = 'u8[16384]{0}', space=vmem, size = 0x4000, scoped, tag = 'output window, operand 0']
    #allocation3 [shape = 's32[2]{0}', space=sflag, size = 0x8, scoped, tag = 'scoped memory for scene_seg_head_pointnet.3']
    %11 = vsyncpa [#allocation3], 0
    %s12 = scalar_lea.sflag [#allocation3], 1
    %13 = vsyncpa %s12, 0
    loop: start=0, step=1, limit=4
    $region2: #{scene_seg_head_pointnet.3} parent=1 // loop_pre_header
      _
    $region3: #{scene_seg_head_pointnet.3} parent=1 // loop_header
      %s15 = sphi 0, %s19
      %p16 = scmp.ge.s32.totalorder %s15, 4
      %s22 = sphi 0, %s34
      %s23 = sphi 0, %s30
      %s24 = sphi 0, %s22
      %s25 = sphi 0, %s23
      %s26 = sphi 0, %s24
      %s27 = sphi 0, %s25
      %s39 = sphi 0, %s41
      %s42 = sphi 0, %s39
      %s43 = sphi 0, %s42
      %s59 = sphi 0, %s43
      %s63 = sphi 0, %s63
      %s65 = sphi 0, %s63
      %s66 = sphi 0, %s65
      %s80 = sphi 0, %s66
      %s84 = sphi 0, %s84
      %s86 = sphi 0, %s84
      %s87 = sphi 0, %s86
      %s101 = sphi 0, %s87
      %s105 = sphi 0, %s105
      %s107 = sphi 0, %s105
      %s108 = sphi 0, %s107
      %s122 = sphi 0, %s108
      %s126 = sphi 0, %s126
      %s128 = sphi 0, %s126
      %s129 = sphi 0, %s128
      %s143 = sphi 0, %s129
      %s147 = sphi 0, %s147
      %s149 = sphi 0, %s147
      %s150 = sphi 0, %s149
      %s164 = sphi 0, %s150
      %s172 = sphi 0, %s174
      %s175 = sphi 0, %s172
      %s176 = sphi 0, %s175
      %s192 = sphi 0, %s176
    $region4: #{scene_seg_head_pointnet.3} parent=1 // loop_header_branch
      %18 = sbr.rel (%p16) target = $region8
    $region5: #{scene_seg_head_pointnet.3} parent=1 // loop_body
      %s20 = ssub.s32 %s15, 1
      %s21 = ssub.s32 %s15, 2
      %s28 = sadd.s32 1, %s23
      %p29 = scmp.ge.s32.totalorder %s28, 1
      %s30 = scalar_select %p29, 0, %s28
      %s31 = sadd.s32 1, %s22
      %s32 = scalar_select %p29, %s31, %s22
      %p33 = scmp.ge.s32.totalorder %s32, 2
      %s34 = scalar_select %p33, 0, %s32
      %s35 = ssub.s32 %s22, %s34
      %s36 = ssub.s32 %s23, %s30
      %s37 = sor.u32 %s35, %s36
      %p38 = scmp.eq.s32.totalorder %s37, 0
      %s40 = sadd.s32 %s39, 1
      %s41 = scalar_select %p38, %s39, %s40
      %p44 = pneg %p38
      %p45 = scmp.eq.s32.totalorder %s15, 1
      %p46 = por %p44, %p45
      %p47 = scmp.ne.s32.totalorder %s39, %s42
      %p48 = scmp.eq.s32.totalorder %s15, 0
      %p49 = por %p47, %p48
      %p50 = scmp.ne.s32.totalorder %s39, %s42
      %p51 = scmp.eq.s32.totalorder %s20, 1
      %p52 = por %p50, %p51
      %p53 = scmp.ne.s32.totalorder %s42, %s43
      %p54 = scmp.eq.s32.totalorder %s20, 0
      %p55 = por %p53, %p54
      %p56 = scmp.ne.s32.totalorder %s42, %s43
      %p57 = scmp.eq.s32.totalorder %s21, 1
      %p58 = por %p56, %p57
      %p60 = scmp.ne.s32.totalorder %s43, %s59
      %p61 = scmp.eq.s32.totalorder %s21, 0
      %p62 = por %p60, %p61
      %s64 = sadd.s32 %s63, 1
      %p67 = scmp.eq.s32.totalorder %s15, 1
      %p68 = scmp.ne.s32.totalorder %s63, %s65
      %p69 = scmp.eq.s32.totalorder %s15, 0
      %p70 = por %p68, %p69
      %p71 = scmp.ne.s32.totalorder %s63, %s65
      %p72 = scmp.eq.s32.totalorder %s20, 1
      %p73 = por %p71, %p72
      %p74 = scmp.ne.s32.totalorder %s65, %s66
      %p75 = scmp.eq.s32.totalorder %s20, 0
      %p76 = por %p74, %p75
      %p77 = scmp.ne.s32.totalorder %s65, %s66
      %p78 = scmp.eq.s32.totalorder %s21, 1
      %p79 = por %p77, %p78
      %p81 = scmp.ne.s32.totalorder %s66, %s80
      %p82 = scmp.eq.s32.totalorder %s21, 0
      %p83 = por %p81, %p82
      %s85 = sadd.s32 %s84, 1
      %p88 = scmp.eq.s32.totalorder %s15, 1
      %p89 = scmp.ne.s32.totalorder %s84, %s86
      %p90 = scmp.eq.s32.totalorder %s15, 0
      %p91 = por %p89, %p90
      %p92 = scmp.ne.s32.totalorder %s84, %s86
      %p93 = scmp.eq.s32.totalorder %s20, 1
      %p94 = por %p92, %p93
      %p95 = scmp.ne.s32.totalorder %s86, %s87
      %p96 = scmp.eq.s32.totalorder %s20, 0
      %p97 = por %p95, %p96
      %p98 = scmp.ne.s32.totalorder %s86, %s87
      %p99 = scmp.eq.s32.totalorder %s21, 1
      %p100 = por %p98, %p99
      %p102 = scmp.ne.s32.totalorder %s87, %s101
      %p103 = scmp.eq.s32.totalorder %s21, 0
      %p104 = por %p102, %p103
      %s106 = sadd.s32 %s105, 1
      %p109 = scmp.eq.s32.totalorder %s15, 1
      %p110 = scmp.ne.s32.totalorder %s105, %s107
      %p111 = scmp.eq.s32.totalorder %s15, 0
      %p112 = por %p110, %p111
      %p113 = scmp.ne.s32.totalorder %s105, %s107
      %p114 = scmp.eq.s32.totalorder %s20, 1
      %p115 = por %p113, %p114
      %p116 = scmp.ne.s32.totalorder %s107, %s108
      %p117 = scmp.eq.s32.totalorder %s20, 0
      %p118 = por %p116, %p117
      %p119 = scmp.ne.s32.totalorder %s107, %s108
      %p120 = scmp.eq.s32.totalorder %s21, 1
      %p121 = por %p119, %p120
      %p123 = scmp.ne.s32.totalorder %s108, %s122
      %p124 = scmp.eq.s32.totalorder %s21, 0
      %p125 = por %p123, %p124
      %s127 = sadd.s32 %s126, 1
      %p130 = scmp.eq.s32.totalorder %s15, 1
      %p131 = scmp.ne.s32.totalorder %s126, %s128
      %p132 = scmp.eq.s32.totalorder %s15, 0
      %p133 = por %p131, %p132
      %p134 = scmp.ne.s32.totalorder %s126, %s128
      %p135 = scmp.eq.s32.totalorder %s20, 1
      %p136 = por %p134, %p135
      %p137 = scmp.ne.s32.totalorder %s128, %s129
      %p138 = scmp.eq.s32.totalorder %s20, 0
      %p139 = por %p137, %p138
      %p140 = scmp.ne.s32.totalorder %s128, %s129
      %p141 = scmp.eq.s32.totalorder %s21, 1
      %p142 = por %p140, %p141
      %p144 = scmp.ne.s32.totalorder %s129, %s143
      %p145 = scmp.eq.s32.totalorder %s21, 0
      %p146 = por %p144, %p145
      %s148 = sadd.s32 %s147, 1
      %p151 = scmp.eq.s32.totalorder %s15, 1
      %p152 = scmp.ne.s32.totalorder %s147, %s149
      %p153 = scmp.eq.s32.totalorder %s15, 0
      %p154 = por %p152, %p153
      %p155 = scmp.ne.s32.totalorder %s147, %s149
      %p156 = scmp.eq.s32.totalorder %s20, 1
      %p157 = por %p155, %p156
      %p158 = scmp.ne.s32.totalorder %s149, %s150
      %p159 = scmp.eq.s32.totalorder %s20, 0
      %p160 = por %p158, %p159
      %p161 = scmp.ne.s32.totalorder %s149, %s150
      %p162 = scmp.eq.s32.totalorder %s21, 1
      %p163 = por %p161, %p162
      %p165 = scmp.ne.s32.totalorder %s150, %s164
      %p166 = scmp.eq.s32.totalorder %s21, 0
      %p167 = por %p165, %p166
      %s168 = ssub.s32 %s22, %s34
      %s169 = ssub.s32 %s23, %s30
      %s170 = sor.u32 %s168, %s169
      %p171 = scmp.eq.s32.totalorder %s170, 0
      %s173 = sadd.s32 %s172, 1
      %s174 = scalar_select %p171, %s172, %s173
      %p177 = pneg %p171
      %p178 = scmp.eq.s32.totalorder %s15, 1
      %p179 = por %p177, %p178
      %p180 = scmp.ne.s32.totalorder %s172, %s175
      %p181 = scmp.eq.s32.totalorder %s15, 0
      %p182 = por %p180, %p181
      %p183 = scmp.ne.s32.totalorder %s172, %s175
      %p184 = scmp.eq.s32.totalorder %s20, 1
      %p185 = por %p183, %p184
      %p186 = scmp.ne.s32.totalorder %s175, %s176
      %p187 = scmp.eq.s32.totalorder %s20, 0
      %p188 = por %p186, %p187
      %p189 = scmp.ne.s32.totalorder %s175, %s176
      %p190 = scmp.eq.s32.totalorder %s21, 1
      %p191 = por %p189, %p190
      %p193 = scmp.ne.s32.totalorder %s176, %s192
      %p194 = scmp.eq.s32.totalorder %s21, 0
      %p195 = por %p193, %p194
      %p196 = scmp.le.s32.totalorder 1, %s15
      %p197 = scmp.lt.s32.totalorder %s15, 3
      %p198 = pnand %p196, %p197
      %p199 = pneg %p198
      // Predicated region
      $region9: #{scene_seg_head_pointnet.3} parent=5 // pred_check
        _
      $region10: #{scene_seg_head_pointnet.3} parent=5 // pred_check_branch
        %201 = sbr.rel (%p198) target = $region12
      $region11: #{scene_seg_head_pointnet.3} parent=5 // pred_region
        %s202 = ssub.s32 %s15, 1
        // Predicated region
        $region13: #{scene_seg_head_pointnet.3} parent=11 // pred_check
          %p203 = pneg %p76
        $region14: #{scene_seg_head_pointnet.3} parent=11 // pred_check_branch
          %205 = sbr.rel (%p203) target = $region16
        $region15: #{scene_seg_head_pointnet.3} parent=11 // pred_region
          _
        $region16: #{scene_seg_head_pointnet.3} parent=11 // pred_fallthru
          _
        // Predicated region
        $region17: #{scene_seg_head_pointnet.3} parent=11 // pred_check
          %p206 = pneg %p97
        $region18: #{scene_seg_head_pointnet.3} parent=11 // pred_check_branch
          %208 = sbr.rel (%p206) target = $region20
        $region19: #{scene_seg_head_pointnet.3} parent=11 // pred_region
          _
        $region20: #{scene_seg_head_pointnet.3} parent=11 // pred_fallthru
          _
        // Predicated region
        $region21: #{scene_seg_head_pointnet.3} parent=11 // pred_check
          %p209 = pneg %p118
        $region22: #{scene_seg_head_pointnet.3} parent=11 // pred_check_branch
          %211 = sbr.rel (%p209) target = $region24
        $region23: #{scene_seg_head_pointnet.3} parent=11 // pred_region
          _
        $region24: #{scene_seg_head_pointnet.3} parent=11 // pred_fallthru
          _
        // Predicated region
        $region25: #{scene_seg_head_pointnet.3} parent=11 // pred_check
          %p212 = pneg %p139
        $region26: #{scene_seg_head_pointnet.3} parent=11 // pred_check_branch
          %214 = sbr.rel (%p212) target = $region28
        $region27: #{scene_seg_head_pointnet.3} parent=11 // pred_region
          _
        $region28: #{scene_seg_head_pointnet.3} parent=11 // pred_fallthru
          _
        // Predicated region
        $region29: #{scene_seg_head_pointnet.3} parent=11 // pred_check
          %p215 = pneg %p160
        $region30: #{scene_seg_head_pointnet.3} parent=11 // pred_check_branch
          %217 = sbr.rel (%p215) target = $region32
        $region31: #{scene_seg_head_pointnet.3} parent=11 // pred_region
          _
        $region32: #{scene_seg_head_pointnet.3} parent=11 // pred_fallthru
          _
      $region12: #{scene_seg_head_pointnet.3} parent=5 // pred_fallthru
        _
      %p218 = scmp.lt.s32.totalorder %s15, 2
      // Predicated region
      $region33: #{scene_seg_head_pointnet.3} parent=5 // pred_check
        %p219 = pneg %p218
      $region34: #{scene_seg_head_pointnet.3} parent=5 // pred_check_branch
        %221 = sbr.rel (%p219) target = $region36
      $region35: #{scene_seg_head_pointnet.3} parent=5 // pred_region
        // Predicated region
        $region37: #{scene_seg_head_pointnet.3} parent=35 // pred_check
          %p222 = pneg %p49
        $region38: #{scene_seg_head_pointnet.3} parent=35 // pred_check_branch
          %224 = sbr.rel (%p222) target = $region40
        $region39: #{scene_seg_head_pointnet.3} parent=35 // pred_region
          %s225 = smul.u32 2, %s23
          %p226 = scmp.lt.s32.totalorder %s22, 1
          %s227 = scalar_select %p226, %s22, 1
          %p228 = scmp.lt.s32.totalorder %s225, 1
          %s229 = scalar_select %p228, %s225, 1
          %s230 = smul.addr %s227, 4
          %s231 = sadd.s32 %s229, %s230
          %s232 = smul.addr %s231, 8
          %s233 = scalar_lea.vmem %s0, %s232
          %s234 = smul.u32 2, %s23
        $region40: #{scene_seg_head_pointnet.3} parent=35 // pred_fallthru
          _
      $region36: #{scene_seg_head_pointnet.3} parent=5 // pred_fallthru
        _
      %p235 = scmp.le.s32.totalorder 1, %s15
      %p236 = scmp.lt.s32.totalorder %s15, 3
      %p237 = pnand %p235, %p236
      %p238 = pneg %p237
      // Predicated region
      $region41: #{scene_seg_head_pointnet.3} parent=5 // pred_check
        _
      $region42: #{scene_seg_head_pointnet.3} parent=5 // pred_check_branch
        %240 = sbr.rel (%p237) target = $region44
      $region43: #{scene_seg_head_pointnet.3} parent=5 // pred_region
        %s241 = ssub.s32 %s15, 1
        %s242 = smul.u32 2, %s25
        %p243 = scmp.lt.s32.totalorder %s24, 1
        %s244 = scalar_select %p243, %s24, 1
        %p245 = scmp.lt.s32.totalorder %s242, 1
        %s246 = scalar_select %p245, %s242, 1
        %s247 = smul.addr %s244, 4
        %s248 = sadd.s32 %s246, %s247
        %s249 = smul.addr %s248, 8
        %s250 = scalar_lea.vmem %s0, %s249
        %p251 = pneg %p55
        %p252 = pneg %p52
        %p253 = pneg %p76
        %p254 = pneg %p73
        %p255 = pneg %p97
        %p256 = pneg %p94
        %p257 = pneg %p118
        %p258 = pneg %p115
        %p259 = pneg %p139
        %p260 = pneg %p136
        %p261 = pneg %p160
        %p262 = pneg %p157
        %p263 = pneg %p188
        %p264 = pneg %p185
        %s265 = sand.u32 %s175, 1
        %s266 = scalar_lea.sflag [#allocation3], %s265
        %s267 = sand.u32 %s175, 1
        %s268 = smul.addr %s267, 16
        %s269 = scalar_lea.vmem [#allocation2], %s268
        %s270 = smul.u32 2, %s25
        %p271 = scmp.lt.s32.totalorder %s24, 1
        %s272 = scalar_select %p271, %s24, 1
        %p273 = scmp.lt.s32.totalorder %s270, 1
        %s274 = scalar_select %p273, %s270, 1
        %s275 = smul.addr %s272, 4
        %s276 = sadd.s32 %s274, %s275
        %s277 = smul.addr %s276, 8
        %s278 = scalar_lea.vmem %s0, %s277
        %s279 = smul.u32 2, %s25
        %s280 = smul.u32 2, %s25
        %v281 = vld [vmem:[%s1] sm:$0xff]
        %v282 = vld [vmem:[%s1 + $0x8] sm:$0xff]
        %v283 = vld [vmem:[%s1 + $0x10] sm:$0xff]
        %v284 = vld [vmem:[%s1 + $0x18] sm:$0xff]
        %v285 = vld [vmem:[%s278] sm:$0xff]
        %v286 = vld [vmem:[%s278 + $0x8] sm:$0xff]
        %v287 = vld [vmem:[%s278 + $0x10] sm:$0xff]
        %v288 = vld [vmem:[%s278 + $0x18] sm:$0xff]
        %vm289 = vcmask 130048
        %v291 = vsel %vm289, %v281, 0
        %v294 = vsel %vm289, %v282, 0
        %v297 = vsel %vm289, %v283, 0
        %v300 = vsel %vm289, %v284, 0
        %302 = vmatprep.subr.mxu0 0.0
        %303 = vmatpush1.msra.mxu0 0.0
        %304 = vmatprep.subr.mxu0 0.0
        %305 = vmatpush1.msra.mxu0 0.0
        %306 = vmatprep.subr.mxu0 0.0
        %307 = vmatpush1.msra.mxu0 0.0
        %308 = vmatprep.subr.mxu0 0.0
        %309 = vmatpush1.msra.mxu0 0.0
        %310 = vmatprep.subr.mxu0 0.0
        %311 = vmatpush1.msra.mxu0 0.0
        %312 = vmatprep.subr.mxu0 0.0
        %313 = vmatpush1.msra.mxu0 0.0
        %314 = vmatprep.subr.mxu0 0.0
        %315 = vmatpush1.msra.mxu0 0.0
        %316 = vmatprep.subr.mxu0 0.0
        %317 = vmatpush1.msra.mxu0 0.0
        %318 = vmatprep.subr.mxu0 0.0
        %319 = vmatpush1.msra.mxu0 0.0
        %320 = vmatprep.subr.mxu0 0.0
        %321 = vmatpush1.msra.mxu0 0.0
        %322 = vmatprep.subr.mxu0 0.0
        %323 = vmatpush1.msra.mxu0 0.0
        %324 = vmatprep.subr.mxu0 0.0
        %325 = vmatpush1.msra.mxu0 0.0
        %326 = vmatprep.subr.mxu0 0.0
        %327 = vmatpush1.msra.mxu0 0.0
        %328 = vmatprep.subr.mxu0 0.0
        %329 = vmatpush1.msra.mxu0 0.0
        %330 = vmatprep.subr.mxu0 %v288
        %331 = vmatpush1.msra.mxu0 %v287
        %332 = vmatprep.subr.mxu0 %v286
        %333 = vmatpush1.msra.mxu0 %v285
        %334 = vmatprep.subr.mxu0 0.0
        %335 = vmatpush2.msra.mxu0 0.0
        %336 = vmatprep.subr.mxu0 0.0
        %337 = vmatpush2.msra.mxu0 0.0
        %338 = vmatprep.subr.mxu0 0.0
        %339 = vmatpush2.msra.mxu0 0.0
        %340 = vmatprep.subr.mxu0 0.0
        %341 = vmatpush2.msra.mxu0 0.0
        %342 = vmatprep.subr.mxu0 0.0
        %343 = vmatpush2.msra.mxu0 0.0
        %344 = vmatprep.subr.mxu0 0.0
        %345 = vmatpush2.msra.mxu0 0.0
        %346 = vmatprep.subr.mxu0 0.0
        %347 = vmatpush2.msra.mxu0 0.0
        %348 = vmatprep.subr.mxu0 0.0
        %349 = vmatpush2.msra.mxu0 0.0
        %350 = vmatprep.subr.mxu0 0.0
        %351 = vmatpush2.msra.mxu0 0.0
        %352 = vmatprep.subr.mxu0 0.0
        %353 = vmatpush2.msra.mxu0 0.0
        %354 = vmatprep.subr.mxu0 0.0
        %355 = vmatpush2.msra.mxu0 0.0
        %356 = vmatprep.subr.mxu0 0.0
        %357 = vmatpush2.msra.mxu0 0.0
        %358 = vmatprep.subr.mxu0 0.0
        %359 = vmatpush2.msra.mxu0 0.0
        %360 = vmatprep.subr.mxu0 0.0
        %361 = vmatpush2.msra.mxu0 0.0
        %362 = vmatprep.subr.mxu0 0.0
        %363 = vmatpush2.msra.mxu0 0.0
        %364 = vmatprep.subr.mxu0 0.0
        %365 = vmatpush2.msra.mxu0 0.0
        %366 = vmatprep.mubr.f32.mxu0 0.0
        %367 = vmatmul.mubr.f32.gmra.mxu0 %v291
        %v368 = vpop.f32.mrf.mxu0
        %v369 = vadd.f32 0.0, %v368
        %v370 = vpop.f32.mrf.mxu0
        %v371 = vadd.f32 0.0, %v370
        %372 = vmatprep.mubr.f32.mxu0 0.0
        %373 = vmatmul.mubr.f32.gmra.mxu0 %v294
        %v374 = vpop.f32.mrf.mxu0
        %v375 = vadd.f32 0.0, %v374
        %v376 = vpop.f32.mrf.mxu0
        %v377 = vadd.f32 0.0, %v376
        %378 = vmatprep.mubr.f32.mxu0 0.0
        %379 = vmatmul.mubr.f32.gmra.mxu0 %v297
        %v380 = vpop.f32.mrf.mxu0
        %v381 = vadd.f32 0.0, %v380
        %v382 = vpop.f32.mrf.mxu0
        %v383 = vadd.f32 0.0, %v382
        %384 = vmatprep.mubr.f32.mxu0 0.0
        %385 = vmatmul.mubr.f32.gmra.mxu0 %v300
        %v386 = vpop.f32.mrf.mxu0
        %v387 = vadd.f32 0.0, %v386
        %v388 = vpop.f32.mrf.mxu0
        %v389 = vadd.f32 0.0, %v388
        %390 = vdwg.mxu0
        %v391 = vld [vmem:[%s2] sm:$0xff]
        %v392 = vld [vmem:[%s2 + $0x8] sm:$0xff]
        %v393 = vld [vmem:[%s2 + $0x10] sm:$0xff]
        %v394 = vld [vmem:[%s2 + $0x18] sm:$0xff]
        %396 = vset.pattern.permute.xlu0 0
        %397 = vperm.xlu0 %396, %v391
        %v398 = vpop.permute.xlu0 %397
        %401 = vset.pattern.permute.xlu0 0
        %402 = vperm.xlu0 %401, %v392
        %v403 = vpop.permute.xlu0 %402
        %406 = vset.pattern.permute.xlu0 0
        %407 = vperm.xlu0 %406, %v393
        %v408 = vpop.permute.xlu0 %407
        %411 = vset.pattern.permute.xlu0 0
        %412 = vperm.xlu0 %411, %v394
        %v413 = vpop.permute.xlu0 %412
        %v415 = vmul.f32 %v369, %v398
        %v416 = vmul.f32 %v371, %v398
        %v417 = vmul.f32 %v375, %v403
        %v418 = vmul.f32 %v377, %v403
        %v419 = vmul.f32 %v381, %v408
        %v420 = vmul.f32 %v383, %v408
        %v421 = vmul.f32 %v387, %v413
        %v422 = vmul.f32 %v389, %v413
        %v423 = vld [vmem:[%s3] sm:$0xff]
        %v424 = vld [vmem:[%s3 + $0x8] sm:$0xff]
        %v425 = vld [vmem:[%s3 + $0x10] sm:$0xff]
        %v426 = vld [vmem:[%s3 + $0x18] sm:$0xff]
        %428 = vset.pattern.permute.xlu0 0
        %429 = vperm.xlu0 %428, %v423
        %v430 = vpop.permute.xlu0 %429
        %433 = vset.pattern.permute.xlu0 0
        %434 = vperm.xlu0 %433, %v424
        %v435 = vpop.permute.xlu0 %434
        %438 = vset.pattern.permute.xlu0 0
        %439 = vperm.xlu0 %438, %v425
        %v440 = vpop.permute.xlu0 %439
        %443 = vset.pattern.permute.xlu0 0
        %444 = vperm.xlu0 %443, %v426
        %v445 = vpop.permute.xlu0 %444
        %v447 = vadd.f32 %v415, %v430
        %v448 = vadd.f32 %v416, %v430
        %v449 = vadd.f32 %v417, %v435
        %v450 = vadd.f32 %v418, %v435
        %v451 = vadd.f32 %v419, %v440
        %v452 = vadd.f32 %v420, %v440
        %v453 = vadd.f32 %v421, %v445
        %v454 = vadd.f32 %v422, %v445
        %v455 = vmax.f32 %v447, 0.0
        %v456 = vmax.f32 %v448, 0.0
        %v457 = vmax.f32 %v449, 0.0
        %v458 = vmax.f32 %v450, 0.0
        %v459 = vmax.f32 %v451, 0.0
        %v460 = vmax.f32 %v452, 0.0
        %v461 = vmax.f32 %v453, 0.0
        %v462 = vmax.f32 %v454, 0.0
        %v463 = vld [vmem:[%s4] sm:$0xff]
        %v464 = vld [vmem:[%s5] sm:$0xff]
        %466 = vset.pattern.permute.xlu0 0
        %467 = vperm.xlu0 %466, %v464
        %v468 = vpop.permute.xlu0 %467
        %vm470 = vcmask 261120
        %v472 = vsel %vm470, %v463, 0
        %474 = vmatprep.subr.mxu0 0.0
        %475 = vmatpush1.msra.mxu0 0.0
        %476 = vmatprep.subr.mxu0 0.0
        %477 = vmatpush1.msra.mxu0 0.0
        %478 = vmatprep.subr.mxu0 0.0
        %479 = vmatpush1.msra.mxu0 0.0
        %480 = vmatprep.subr.mxu0 0.0
        %481 = vmatpush1.msra.mxu0 0.0
        %482 = vmatprep.subr.mxu0 0.0
        %483 = vmatpush1.msra.mxu0 0.0
        %484 = vmatprep.subr.mxu0 0.0
        %485 = vmatpush1.msra.mxu0 0.0
        %486 = vmatprep.subr.mxu0 0.0
        %487 = vmatpush1.msra.mxu0 0.0
        %488 = vmatprep.subr.mxu0 0.0
        %489 = vmatpush1.msra.mxu0 0.0
        %490 = vmatprep.subr.mxu0 0.0
        %491 = vmatpush1.msra.mxu0 0.0
        %492 = vmatprep.subr.mxu0 0.0
        %493 = vmatpush1.msra.mxu0 0.0
        %494 = vmatprep.subr.mxu0 0.0
        %495 = vmatpush1.msra.mxu0 0.0
        %496 = vmatprep.subr.mxu0 0.0
        %497 = vmatpush1.msra.mxu0 0.0
        %498 = vmatprep.subr.mxu0 %v462
        %499 = vmatpush1.msra.mxu0 %v461
        %500 = vmatprep.subr.mxu0 %v460
        %501 = vmatpush1.msra.mxu0 %v459
        %502 = vmatprep.subr.mxu0 %v458
        %503 = vmatpush1.msra.mxu0 %v457
        %504 = vmatprep.subr.mxu0 %v456
        %505 = vmatpush1.msra.mxu0 %v455
        %506 = vmatprep.subr.mxu0 0.0
        %507 = vmatpush2.msra.mxu0 0.0
        %508 = vmatprep.subr.mxu0 0.0
        %509 = vmatpush2.msra.mxu0 0.0
        %510 = vmatprep.subr.mxu0 0.0
        %511 = vmatpush2.msra.mxu0 0.0
        %512 = vmatprep.subr.mxu0 0.0
        %513 = vmatpush2.msra.mxu0 0.0
        %514 = vmatprep.subr.mxu0 0.0
        %515 = vmatpush2.msra.mxu0 0.0
        %516 = vmatprep.subr.mxu0 0.0
        %517 = vmatpush2.msra.mxu0 0.0
        %518 = vmatprep.subr.mxu0 0.0
        %519 = vmatpush2.msra.mxu0 0.0
        %520 = vmatprep.subr.mxu0 0.0
        %521 = vmatpush2.msra.mxu0 0.0
        %522 = vmatprep.subr.mxu0 0.0
        %523 = vmatpush2.msra.mxu0 0.0
        %524 = vmatprep.subr.mxu0 0.0
        %525 = vmatpush2.msra.mxu0 0.0
        %526 = vmatprep.subr.mxu0 0.0
        %527 = vmatpush2.msra.mxu0 0.0
        %528 = vmatprep.subr.mxu0 0.0
        %529 = vmatpush2.msra.mxu0 0.0
        %530 = vmatprep.subr.mxu0 0.0
        %531 = vmatpush2.msra.mxu0 0.0
        %532 = vmatprep.subr.mxu0 0.0
        %533 = vmatpush2.msra.mxu0 0.0
        %534 = vmatprep.subr.mxu0 0.0
        %535 = vmatpush2.msra.mxu0 0.0
        %536 = vmatprep.subr.mxu0 0.0
        %537 = vmatpush2.msra.mxu0 0.0
        %538 = vmatprep.mubr.f32.mxu0 0.0
        %539 = vmatmul.mubr.f32.gmra.mxu0 %v472
        %v540 = vpop.f32.mrf.mxu0
        %v541 = vadd.f32 %v468, %v540
        %v542 = vpop.f32.mrf.mxu0
        %v543 = vadd.f32 %v468, %v542
        %544 = vdwg.mxu0
        %545 = vst [vmem:[%s269] sm:$0xff] %v541
        %546 = vst [vmem:[%s269 + $0x8] sm:$0xff] %v543
        %s547 = sand.u32 %s175, 1
        %s548 = scalar_lea.sflag [#allocation3], %s547
        %s549 = sand.u32 %s175, 1
        %s550 = smul.addr %s549, 16
        %s551 = scalar_lea.vmem [#allocation2], %s550
        // Predicated region
        $region45: #{scene_seg_head_pointnet.3} parent=43 // pred_check
          %p552 = pneg %p185
        $region46: #{scene_seg_head_pointnet.3} parent=43 // pred_check_branch
          %554 = sbr.rel (%p552) target = $region48
        $region47: #{scene_seg_head_pointnet.3} parent=43 // pred_region
          %s555 = smul.u32 2, %s25
          %s557 = ssub.s32 256, 256
          %558 = vsyncadd %s548, %s557
          %s559 = smul.addr %s24, 2
          %s560 = sadd.s32 %s555, %s559
          %s561 = smul.addr %s560, 128
          %s562 = scalar_lea.hbm %s6, %s561
          %s564 = sshll.u32 %s551, 4
          %s565 = int_to_ptr.vmem [resolvable:$true] %s564
          %567 = dma.vmem_to_hbm [thread:$0]  %s565, 256, %s562, %s548
        $region48: #{scene_seg_head_pointnet.3} parent=43 // pred_fallthru
          _
      $region44: #{scene_seg_head_pointnet.3} parent=5 // pred_fallthru
        _
      %p568 = scmp.le.s32.totalorder 2, %s15
      // Predicated region
      $region49: #{scene_seg_head_pointnet.3} parent=5 // pred_check
        %p569 = pneg %p568
      $region50: #{scene_seg_head_pointnet.3} parent=5 // pred_check_branch
        %571 = sbr.rel (%p569) target = $region52
      $region51: #{scene_seg_head_pointnet.3} parent=5 // pred_region
        %s572 = ssub.s32 %s15, 2
        // Predicated region
        $region53: #{scene_seg_head_pointnet.3} parent=51 // pred_check
          %p573 = pneg %p191
        $region54: #{scene_seg_head_pointnet.3} parent=51 // pred_check_branch
          %575 = sbr.rel (%p573) target = $region56
        $region55: #{scene_seg_head_pointnet.3} parent=51 // pred_region
          %s576 = sand.u32 %s176, 1
          %s577 = scalar_lea.sflag [#allocation3], %s576
          %s578 = sand.u32 %s176, 1
          %s579 = smul.addr %s578, 16
          %s580 = scalar_lea.vmem [#allocation2], %s579
          %581 = dma.done %s577, 256
        $region56: #{scene_seg_head_pointnet.3} parent=51 // pred_fallthru
          _
      $region52: #{scene_seg_head_pointnet.3} parent=5 // pred_fallthru
        _
    $region6: #{scene_seg_head_pointnet.3} parent=1 // loop_footer
      %s19 = sadd.s32 1, %s15
    $region7: #{scene_seg_head_pointnet.3} parent=1 // loop_footer_branch
      %14 = sbr.rel target = $region3
    $region8: #{scene_seg_head_pointnet.3} parent=1 // loop_exit
      _
    %582 = vsyncpa [#allocation3], 1
    %s583 = scalar_lea.sflag [#allocation3], 1
    %584 = vsyncpa %s583, 1

</llo_original>
